<compile_context>
chip_gen: v5e
topology: v5e:2x2
jax: 0.10.0
libtpu: 0.0.40
codegen_flags: <defaults>
</compile_context>

<pallas_src>
import functools

import jax
import jax.numpy as jnp
from jax.experimental import pallas as pl
from jax.experimental.pallas import tpu as pltpu


def hypernet_kernel(sow_ref, w_ref, h0_ref, out_ref, hout_ref, h_scratch, *, H):
    """One grid step == one HyperNetwork.forward(SoW) over both pos-embeddings.

    sow_ref  : SMEM (N,)     raw SoW values (log10 applied in-kernel)
    w_ref    : VMEM (64,128) prepacked parameters (see pack_weights)
    h0_ref   : VMEM (1, H)   initial GRU hidden state (self.hgru at entry)
    out_ref  : VMEM (2, 128) per-step outputs, lanes [0:O] valid (lane-dense)
    hout_ref : VMEM (1, H)   final hidden state (self.hgru after the sequence)
    h_scratch: VMEM (1, H)   hidden state carried across grid steps
    """
    step = pl.program_id(0)

    @pl.when(step == 0)
    def _():
        h_scratch[...] = h0_ref[...]

    # ---- unpack the single prepacked weight tile (cheap sublane/lane slices)
    b1         = w_ref[0:1, 0:H]                  # (1, H)   fc1 bias
    bias_gx    = w_ref[1:2, 0:3 * H]              # (1, 3H)  b_ih (r/z pre-summed with b_hh)
    bhh_n      = w_ref[2:3, 0:H]                  # (1, H)   n-gate hidden bias
    b2_pad     = w_ref[3:4, :]                    # (1, 128) fc2 bias, zero past O
    pe_contrib = w_ref[4:6, 0:H]                  # (2, H)   pe * fc1_w_pe for pe = 0, 1
    w1_sow     = w_ref[6:7, 0:H]                  # (1, H)   fc1 weight column for log10(SoW)
    wgru       = w_ref[8:8 + 2 * H, 0:3 * H]      # (2H, 3H) [W_ih^T ; W_hh^T] (gate order r,z,n)
    whh        = w_ref[8 + H:8 + 2 * H, 0:3 * H]  # (H, 3H)  W_hh^T
    w2_pad     = w_ref[8 + 2 * H:8 + 3 * H, :]    # (H, 128) fc2 weight, zero past O

    # ---- fc1 for BOTH position embeddings (off the serial chain)
    sow_log = jnp.log10(jnp.full((1, 1), sow_ref[step], jnp.float32))      # (1, 1)
    x_all = jnp.maximum(pe_contrib + (sow_log * w1_sow + b1), 0.0)         # (2, H)

    h0 = h_scratch[...]                                                    # (1, H)

    # ---- one MXU pass yields gx(t=0), gx(t=1) and gh(t=0)
    lhs = jnp.concatenate(
        [jnp.concatenate([x_all, jnp.zeros((2, H), jnp.float32)], axis=1),
         jnp.concatenate([jnp.zeros((1, H), jnp.float32), h0], axis=1)],
        axis=0)                                                            # (3, 2H)
    big = jnp.dot(lhs, wgru, preferred_element_type=jnp.float32)           # (3, 3H)
    gx_all = big[0:2, :] + bias_gx                                         # (2, 3H)
    gh0 = big[2:3, :]                                                      # (1, 3H)

    def gru_cell(gx, gh, h_prev):
        r = jax.nn.sigmoid(gx[:, 0:H] + gh[:, 0:H])
        z = jax.nn.sigmoid(gx[:, H:2 * H] + gh[:, H:2 * H])
        n = jnp.tanh(gx[:, 2 * H:] + r * (gh[:, 2 * H:] + bhh_n))
        return (1.0 - z) * n + z * h_prev

    # ---- serial recurrence: only ONE h-dependent matmul remains on the chain
    h1 = gru_cell(gx_all[0:1, :], gh0, h0)                                 # (1, H)
    gh1 = jnp.dot(h1, whh, preferred_element_type=jnp.float32)             # (1, 3H)
    h2 = gru_cell(gx_all[1:2, :], gh1, h1)                                 # (1, H)

    # ---- batched fc2: one matmul, one lane-dense (2, 128) unmasked store
    h_all = jnp.concatenate([h1, h2], axis=0)                              # (2, H)
    out_ref[...] = jnp.dot(h_all, w2_pad,
                           preferred_element_type=jnp.float32) + b2_pad    # (2, 128)

    h_scratch[...] = h2
    hout_ref[...] = h2


def pack_weights(params, hidden_size, output_size):
    """Pack every parameter into one (64, 128) f32 array (single weight DMA)."""
    w1, b1, wih, whh, bih, bhh, w2, b2 = params
    H, O = hidden_size, output_size
    assert H % 8 == 0 and 3 * H <= 128 and O <= 128 and 8 + 3 * H <= 64

    # r/z gate biases can be pre-summed; n-gate hidden bias stays separate
    # (PyTorch GRU: n = tanh(W_in x + b_in + r * (W_hn h + b_hn))).
    bias_gx = jnp.concatenate(
        [bih[:, :2 * H] + bhh[:, :2 * H], bih[:, 2 * H:]], axis=1)         # (1, 3H)

    W = jnp.zeros((64, 128), jnp.float32)
    W = W.at[0, :H].set(b1[0])                       # fc1 bias
    W = W.at[1, :3 * H].set(bias_gx[0])              # GRU input-side bias
    W = W.at[2, :H].set(bhh[0, 2 * H:])              # n-gate hidden bias
    W = W.at[3, :O].set(b2[0])                       # fc2 bias (padded to 128 lanes)
    # rows 4-5: pe contribution (pe=0 -> zeros, pe=1 -> fc1 weight column for pe)
    W = W.at[5, :H].set(w1[0])
    W = W.at[6, :H].set(w1[1])                       # fc1 weight column for log10(SoW)
    W = W.at[8:8 + 2 * H, :3 * H].set(jnp.concatenate([wih, whh], axis=0))
    W = W.at[8 + 2 * H:8 + 3 * H, :O].set(w2)        # fc2 weight (padded to 128 lanes)
    return W


@functools.partial(jax.jit, static_argnames=("output_size",))
def hypernetwork_forward_seq(sows, weights, h0, *, output_size):
    """Run N consecutive HyperNetwork.forward calls (hidden carried) in ONE
    pallas_call; weights stay VMEM-resident across the grid."""
    N = sows.shape[0]
    H = h0.shape[1]

    out_pad, h_new = pl.pallas_call(
        functools.partial(hypernet_kernel, H=H),
        out_shape=(jax.ShapeDtypeStruct((N, 2, 128), jnp.float32),
                   jax.ShapeDtypeStruct((1, H), jnp.float32)),
        grid_spec=pltpu.PrefetchScalarGridSpec(
            num_scalar_prefetch=0,
            grid=(N,),
            in_specs=[
                pl.BlockSpec(memory_space=pltpu.MemorySpace.SMEM),      # sows
                pl.BlockSpec((64, 128), lambda i: (0, 0)),              # weights (resident)
                pl.BlockSpec((1, H), lambda i: (0, 0)),                 # h0 (resident)
            ],
            out_specs=(
                pl.BlockSpec((None, 2, 128), lambda i: (i, 0, 0)),      # per-step outputs
                pl.BlockSpec((1, H), lambda i: (0, 0)),                 # final hidden
            ),
            scratch_shapes=[pltpu.VMEM((1, H), jnp.float32)],           # carried hidden
        ),
        compiler_params=pltpu.CompilerParams(
            dimension_semantics=("arbitrary",)),   # serial: hidden carried step->step
    )(sows, weights, h0)

    return out_pad[:, :, :output_size], h_new


def hypernetwork_forward(sow, weights, h0, *, output_size):
    """Single module.forward(SoW): returns (outputs (2, O), new hidden (1, H))."""
    outs, h_new = hypernetwork_forward_seq(
        jnp.reshape(jnp.asarray(sow, jnp.float32), (1,)), weights, h0,
        output_size=output_size)
    return outs[0], h_new


def init_params(key, input_size, hidden_size, output_size):
    """Deterministic PyTorch-style uniform init. Weights stored transposed."""
    ks = jax.random.split(key, 8)

    def unif(k, shape, fan_in):
        bound = 1.0 / jnp.sqrt(fan_in)
        return jax.random.uniform(k, shape, jnp.float32, -bound, bound)

    w1 = unif(ks[0], (input_size, hidden_size), input_size)          # fc1.weight^T
    b1 = unif(ks[1], (1, hidden_size), input_size)                   # fc1.bias
    wih = unif(ks[2], (hidden_size, 3 * hidden_size), hidden_size)   # gru.weight_ih^T
    whh = unif(ks[3], (hidden_size, 3 * hidden_size), hidden_size)   # gru.weight_hh^T
    bih = unif(ks[4], (1, 3 * hidden_size), hidden_size)
    bhh = unif(ks[5], (1, 3 * hidden_size), hidden_size)
    w2 = unif(ks[6], (hidden_size, output_size), hidden_size)        # fc2.weight^T
    b2 = unif(ks[7], (1, output_size), hidden_size)
    return (w1, b1, wih, whh, bih, bhh, w2, b2)


def reference_forward(sows, params, h0):
    """Pure-JAX reference reproducing the PyTorch module semantics for a
    sequence of forward() calls (hidden state carried across calls)."""
    w1, b1, wih, whh, bih, bhh, w2, b2 = params
    H = h0.shape[1]
    h = h0
    all_outs = []
    for i in range(sows.shape[0]):
        sow_log = jnp.log10(sows[i])
        outs = []
        for pe in (0.0, 1.0):
            x = (jnp.array([[pe, 0.0]], jnp.float32)
                 + jnp.array([[0.0, 1.0]], jnp.float32) * sow_log)
            x = jnp.maximum(x @ w1 + b1, 0.0)
            gx = x @ wih + bih
            gh = h @ whh + bhh
            r = jax.nn.sigmoid(gx[:, 0:H] + gh[:, 0:H])
            z = jax.nn.sigmoid(gx[:, H:2 * H] + gh[:, H:2 * H])
            n = jnp.tanh(gx[:, 2 * H:] + r * gh[:, 2 * H:])
            h = (1.0 - z) * n + z * h
            outs.append((h @ w2 + b2)[0])
        all_outs.append(jnp.stack(outs))
    return jnp.stack(all_outs), h


if __name__ == "__main__":
    # args.hnet_hidden_size_discount = 2, output_size = 32 -> hidden = 16
    # SoW_len = 1 (forward builds a length-2 input: [pe, log10(SoW)])
    SoW_len = 1
    input_size = 1 + SoW_len
    output_size = 32
    hidden_size = output_size // 2

    key = jax.random.PRNGKey(0)
    k_sow, k_params = jax.random.split(key)
    params = init_params(k_params, input_size, hidden_size, output_size)
    weights = pack_weights(params, hidden_size, output_size)
    h0 = jnp.zeros((1, hidden_size), jnp.float32)          # init_hidden()

    # --- single forward (exactly module.forward(SoW)) ------------------------
    sow = jax.random.uniform(k_sow, (), jnp.float32, 1.0, 100.0)  # positive SoW
    outs, h1 = hypernetwork_forward(sow, weights, h0, output_size=output_size)
    jax.block_until_ready(outs)
    jax.block_until_ready(h1)

    ref_outs, ref_h = reference_forward(jnp.reshape(sow, (1,)), params, h0)
    assert outs.shape == (2, output_size)
    assert h1.shape == (1, hidden_size)
    assert jnp.allclose(outs, ref_outs[0], atol=1e-5, rtol=1e-5)
    assert jnp.allclose(h1, ref_h, atol=1e-5, rtol=1e-5)

    # --- sequence of forwards in ONE pallas_call (weights VMEM-resident) -----
    sows = jax.random.uniform(jax.random.PRNGKey(1), (4,), jnp.float32, 1.0, 100.0)
    outs_seq, h_seq = hypernetwork_forward_seq(sows, weights, h0,
                                               output_size=output_size)
    jax.block_until_ready(outs_seq)
    jax.block_until_ready(h_seq)

    ref_seq, ref_hseq = reference_forward(sows, params, h0)
    assert outs_seq.shape == (4, 2, output_size)
    assert jnp.allclose(outs_seq, ref_seq, atol=1e-5, rtol=1e-5)
    assert jnp.allclose(h_seq, ref_hseq, atol=1e-5, rtol=1e-5)

    print("KERNEL_OK")
</pallas_src>

<mosaic_0001>
module attributes {stable_mosaic.version = 11 : i64} {
  func.func @hypernet_kernel(%arg0: i32, %arg1: memref<1xf32, #tpu.memory_space<smem>>, %arg2: memref<64x128xf32, #tpu.memory_space<vmem>>, %arg3: memref<1x16xf32, #tpu.memory_space<vmem>>, %arg4: memref<1x2x128xf32, #tpu.memory_space<vmem>>, %arg5: memref<1x16xf32, #tpu.memory_space<vmem>>, %arg6: memref<1x16xf32, #tpu.memory_space<vmem>>) attributes {dimension_semantics = [#tpu.dimension_semantics<arbitrary>], iteration_bounds = array<i64: 1>, scalar_prefetch = 0 : i64, scratch_operands = 1 : i64, tpu.core_type = #tpu.core_type<tc>, window_params = [{transform_indices = @transform_0, window_bounds = array<i64: 1>}, {pipeline_mode = #tpu.pipeline_mode<synchronous>, transform_indices = @transform_1, window_bounds = array<i64: 64, 128>}, {pipeline_mode = #tpu.pipeline_mode<synchronous>, transform_indices = @transform_2, window_bounds = array<i64: 1, 16>}, {transform_indices = @transform_3, window_bounds = array<i64: 1, 2, 128>}, {pipeline_mode = #tpu.pipeline_mode<synchronous>, transform_indices = @transform_4, window_bounds = array<i64: 1, 16>}]} {
    %c0_i32 = arith.constant 0 : i32
    %0 = arith.cmpi eq, %arg0, %c0_i32 : i32
    %1 = arith.extui %0 : i1 to i32
    %c0_i32_0 = arith.constant 0 : i32
    %2 = arith.cmpi ne, %1, %c0_i32_0 : i32
    scf.if %2 {
      %c0_31 = arith.constant 0 : index
      %c0_32 = arith.constant 0 : index
      %102 = vector.load %arg3[%c0_31, %c0_32] : memref<1x16xf32, #tpu.memory_space<vmem>>, vector<1x16xf32>
      %c0_33 = arith.constant 0 : index
      %c0_34 = arith.constant 0 : index
      %103 = vector.load %arg6[%c0_33, %c0_34] : memref<1x16xf32, #tpu.memory_space<vmem>>, vector<1x16xf32>
      tpu.vector_store %arg6[%c0_33, %c0_34], %102 {strides = array<i32>} : memref<1x16xf32, #tpu.memory_space<vmem>>, vector<1x16xf32>,
    } else {
    }
    %c0 = arith.constant 0 : index
    %c0_1 = arith.constant 0 : index
    %3 = vector.load %arg2[%c0, %c0_1] : memref<64x128xf32, #tpu.memory_space<vmem>>, vector<1x16xf32>
    %c1 = arith.constant 1 : index
    %c0_2 = arith.constant 0 : index
    %4 = vector.load %arg2[%c1, %c0_2] : memref<64x128xf32, #tpu.memory_space<vmem>>, vector<1x48xf32>
    %c2 = arith.constant 2 : index
    %c0_3 = arith.constant 0 : index
    %5 = vector.load %arg2[%c2, %c0_3] : memref<64x128xf32, #tpu.memory_space<vmem>>, vector<1x16xf32>
    %c3 = arith.constant 3 : index
    %c0_4 = arith.constant 0 : index
    %6 = vector.load %arg2[%c3, %c0_4] : memref<64x128xf32, #tpu.memory_space<vmem>>, vector<1x128xf32>
    %c4 = arith.constant 4 : index
    %c0_5 = arith.constant 0 : index
    %7 = vector.load %arg2[%c4, %c0_5] : memref<64x128xf32, #tpu.memory_space<vmem>>, vector<2x16xf32>
    %c6 = arith.constant 6 : index
    %c0_6 = arith.constant 0 : index
    %8 = vector.load %arg2[%c6, %c0_6] : memref<64x128xf32, #tpu.memory_space<vmem>>, vector<1x16xf32>
    %c8 = arith.constant 8 : index
    %c0_7 = arith.constant 0 : index
    %9 = vector.load %arg2[%c8, %c0_7] : memref<64x128xf32, #tpu.memory_space<vmem>>, vector<32x48xf32>
    %c24 = arith.constant 24 : index
    %c0_8 = arith.constant 0 : index
    %10 = vector.load %arg2[%c24, %c0_8] : memref<64x128xf32, #tpu.memory_space<vmem>>, vector<16x48xf32>
    %c40 = arith.constant 40 : index
    %c0_9 = arith.constant 0 : index
    %11 = vector.load %arg2[%c40, %c0_9] : memref<64x128xf32, #tpu.memory_space<vmem>>, vector<16x128xf32>
    %12 = arith.index_cast %arg0 : i32 to index
    %13 = memref.load %arg1[%12] : memref<1xf32, #tpu.memory_space<smem>>
    %14 = vector.broadcast %13 : f32 to vector<1x1xf32>
    %15 = math.log %14 : vector<1x1xf32>
    %cst = arith.constant 0.434294492 : f32
    %16 = vector.broadcast %cst : f32 to vector<1x1xf32>
    %17 = arith.mulf %15, %16 : vector<1x1xf32>
    %18 = vector.broadcast %17 : vector<1x1xf32> to vector<1x16xf32>
    %19 = arith.mulf %18, %8 : vector<1x16xf32>
    %20 = arith.addf %19, %3 : vector<1x16xf32>
    %21 = vector.broadcast %20 : vector<1x16xf32> to vector<2x16xf32>
    %22 = arith.addf %7, %21 : vector<2x16xf32>
    %cst_10 = arith.constant 0.000000e+00 : f32
    %23 = vector.broadcast %cst_10 : f32 to vector<2x16xf32>
    %24 = arith.maximumf %22, %23 : vector<2x16xf32>
    %c0_11 = arith.constant 0 : index
    %c0_12 = arith.constant 0 : index
    %25 = vector.load %arg6[%c0_11, %c0_12] : memref<1x16xf32, #tpu.memory_space<vmem>>, vector<1x16xf32>
    %cst_13 = arith.constant 0.000000e+00 : f32
    %26 = vector.broadcast %cst_13 : f32 to vector<2x16xf32>
    %27 = tpu.concatenate %24, %26 in 1 : vector<2x16xf32>, vector<2x16xf32> -> vector<2x32xf32>
    %cst_14 = arith.constant 0.000000e+00 : f32
    %28 = vector.broadcast %cst_14 : f32 to vector<1x16xf32>
    %29 = tpu.concatenate %28, %25 in 1 : vector<1x16xf32>, vector<1x16xf32> -> vector<1x32xf32>
    %30 = tpu.concatenate %27, %29 in 0 : vector<2x32xf32>, vector<1x32xf32> -> vector<3x32xf32>
    %cst_15 = arith.constant dense<0.000000e+00> : vector<3x48xf32>
    %31 = tpu.matmul %30, %9, %cst_15 {dimension_numbers = #tpu.dot_dimension_numbers<[1], [0], [0], [1], [0, 0, 1, 1], [], []>} : vector<3x32xf32>, vector<32x48xf32>, vector<3x48xf32> -> vector<3x48xf32>
    %32 = vector.extract_strided_slice %31 {offsets = [0, 0], sizes = [2, 48], strides = [1, 1]} : vector<3x48xf32> to vector<2x48xf32>
    %33 = vector.broadcast %4 : vector<1x48xf32> to vector<2x48xf32>
    %34 = arith.addf %32, %33 : vector<2x48xf32>
    %35 = vector.extract_strided_slice %31 {offsets = [2, 0], sizes = [1, 48], strides = [1, 1]} : vector<3x48xf32> to vector<1x48xf32>
    %36 = vector.extract_strided_slice %34 {offsets = [0, 0], sizes = [1, 48], strides = [1, 1]} : vector<2x48xf32> to vector<1x48xf32>
    %37 = vector.extract_strided_slice %36 {offsets = [0, 0], sizes = [1, 16], strides = [1, 1]} : vector<1x48xf32> to vector<1x16xf32>
    %38 = vector.extract_strided_slice %35 {offsets = [0, 0], sizes = [1, 16], strides = [1, 1]} : vector<1x48xf32> to vector<1x16xf32>
    %39 = arith.addf %37, %38 : vector<1x16xf32>
    %40 = arith.negf %39 : vector<1x16xf32>
    %41 = math.exp %40 : vector<1x16xf32>
    %cst_16 = arith.constant 1.000000e+00 : f32
    %42 = vector.broadcast %cst_16 : f32 to vector<1x16xf32>
    %43 = arith.addf %42, %41 : vector<1x16xf32>
    %44 = arith.divf %42, %43 : vector<1x16xf32>
    %45 = vector.extract_strided_slice %36 {offsets = [0, 16], sizes = [1, 16], strides = [1, 1]} : vector<1x48xf32> to vector<1x16xf32>
    %46 = vector.extract_strided_slice %35 {offsets = [0, 16], sizes = [1, 16], strides = [1, 1]} : vector<1x48xf32> to vector<1x16xf32>
    %47 = arith.addf %45, %46 : vector<1x16xf32>
    %48 = arith.negf %47 : vector<1x16xf32>
    %49 = math.exp %48 : vector<1x16xf32>
    %cst_17 = arith.constant 1.000000e+00 : f32
    %50 = vector.broadcast %cst_17 : f32 to vector<1x16xf32>
    %51 = arith.addf %50, %49 : vector<1x16xf32>
    %52 = arith.divf %50, %51 : vector<1x16xf32>
    %53 = vector.extract_strided_slice %36 {offsets = [0, 32], sizes = [1, 16], strides = [1, 1]} : vector<1x48xf32> to vector<1x16xf32>
    %54 = vector.extract_strided_slice %35 {offsets = [0, 32], sizes = [1, 16], strides = [1, 1]} : vector<1x48xf32> to vector<1x16xf32>
    %55 = arith.addf %54, %5 : vector<1x16xf32>
    %56 = arith.mulf %44, %55 : vector<1x16xf32>
    %57 = arith.addf %53, %56 : vector<1x16xf32>
    %58 = math.tanh %57 : vector<1x16xf32>
    %cst_18 = arith.constant 1.000000e+00 : f32
    %59 = vector.broadcast %cst_18 : f32 to vector<1x16xf32>
    %60 = arith.subf %59, %52 : vector<1x16xf32>
    %61 = arith.mulf %60, %58 : vector<1x16xf32>
    %62 = arith.mulf %52, %25 : vector<1x16xf32>
    %63 = arith.addf %61, %62 : vector<1x16xf32>
    %cst_19 = arith.constant dense<0.000000e+00> : vector<1x48xf32>
    %64 = tpu.matmul %63, %10, %cst_19 {dimension_numbers = #tpu.dot_dimension_numbers<[1], [0], [0], [1], [0, 0, 1, 1], [], []>} : vector<1x16xf32>, vector<16x48xf32>, vector<1x48xf32> -> vector<1x48xf32>
    %65 = vector.extract_strided_slice %34 {offsets = [1, 0], sizes = [1, 48], strides = [1, 1]} : vector<2x48xf32> to vector<1x48xf32>
    %66 = vector.extract_strided_slice %65 {offsets = [0, 0], sizes = [1, 16], strides = [1, 1]} : vector<1x48xf32> to vector<1x16xf32>
    %67 = vector.extract_strided_slice %64 {offsets = [0, 0], sizes = [1, 16], strides = [1, 1]} : vector<1x48xf32> to vector<1x16xf32>
    %68 = arith.addf %66, %67 : vector<1x16xf32>
    %69 = arith.negf %68 : vector<1x16xf32>
    %70 = math.exp %69 : vector<1x16xf32>
    %cst_20 = arith.constant 1.000000e+00 : f32
    %71 = vector.broadcast %cst_20 : f32 to vector<1x16xf32>
    %72 = arith.addf %71, %70 : vector<1x16xf32>
    %73 = arith.divf %71, %72 : vector<1x16xf32>
    %74 = vector.extract_strided_slice %65 {offsets = [0, 16], sizes = [1, 16], strides = [1, 1]} : vector<1x48xf32> to vector<1x16xf32>
    %75 = vector.extract_strided_slice %64 {offsets = [0, 16], sizes = [1, 16], strides = [1, 1]} : vector<1x48xf32> to vector<1x16xf32>
    %76 = arith.addf %74, %75 : vector<1x16xf32>
    %77 = arith.negf %76 : vector<1x16xf32>
    %78 = math.exp %77 : vector<1x16xf32>
    %cst_21 = arith.constant 1.000000e+00 : f32
    %79 = vector.broadcast %cst_21 : f32 to vector<1x16xf32>
    %80 = arith.addf %79, %78 : vector<1x16xf32>
    %81 = arith.divf %79, %80 : vector<1x16xf32>
    %82 = vector.extract_strided_slice %65 {offsets = [0, 32], sizes = [1, 16], strides = [1, 1]} : vector<1x48xf32> to vector<1x16xf32>
    %83 = vector.extract_strided_slice %64 {offsets = [0, 32], sizes = [1, 16], strides = [1, 1]} : vector<1x48xf32> to vector<1x16xf32>
    %84 = arith.addf %83, %5 : vector<1x16xf32>
    %85 = arith.mulf %73, %84 : vector<1x16xf32>
    %86 = arith.addf %82, %85 : vector<1x16xf32>
    %87 = math.tanh %86 : vector<1x16xf32>
    %cst_22 = arith.constant 1.000000e+00 : f32
    %88 = vector.broadcast %cst_22 : f32 to vector<1x16xf32>
    %89 = arith.subf %88, %81 : vector<1x16xf32>
    %90 = arith.mulf %89, %87 : vector<1x16xf32>
    %91 = arith.mulf %81, %63 : vector<1x16xf32>
    %92 = arith.addf %90, %91 : vector<1x16xf32>
    %93 = tpu.concatenate %63, %92 in 0 : vector<1x16xf32>, vector<1x16xf32> -> vector<2x16xf32>
    %cst_23 = arith.constant dense<0.000000e+00> : vector<2x128xf32>
    %94 = tpu.matmul %93, %11, %cst_23 {dimension_numbers = #tpu.dot_dimension_numbers<[1], [0], [0], [1], [0, 0, 1, 1], [], []>} : vector<2x16xf32>, vector<16x128xf32>, vector<2x128xf32> -> vector<2x128xf32>
    %95 = vector.broadcast %6 : vector<1x128xf32> to vector<2x128xf32>
    %96 = arith.addf %94, %95 : vector<2x128xf32>
    %c0_24 = arith.constant 0 : index
    %c0_25 = arith.constant 0 : index
    %c0_26 = arith.constant 0 : index
    %97 = vector.load %arg4[%c0_24, %c0_25, %c0_26] : memref<1x2x128xf32, #tpu.memory_space<vmem>>, vector<1x2x128xf32>
    %98 = vector.shape_cast %97 : vector<1x2x128xf32> to vector<2x128xf32>
    %99 = vector.shape_cast %96 : vector<2x128xf32> to vector<1x2x128xf32>
    tpu.vector_store %arg4[%c0_24, %c0_25, %c0_26], %99 {strides = array<i32>} : memref<1x2x128xf32, #tpu.memory_space<vmem>>, vector<1x2x128xf32>,
    %c0_27 = arith.constant 0 : index
    %c0_28 = arith.constant 0 : index
    %100 = vector.load %arg6[%c0_27, %c0_28] : memref<1x16xf32, #tpu.memory_space<vmem>>, vector<1x16xf32>
    tpu.vector_store %arg6[%c0_27, %c0_28], %92 {strides = array<i32>} : memref<1x16xf32, #tpu.memory_space<vmem>>, vector<1x16xf32>,
    %c0_29 = arith.constant 0 : index
    %c0_30 = arith.constant 0 : index
    %101 = vector.load %arg5[%c0_29, %c0_30] : memref<1x16xf32, #tpu.memory_space<vmem>>, vector<1x16xf32>
    tpu.vector_store %arg5[%c0_29, %c0_30], %92 {strides = array<i32>} : memref<1x16xf32, #tpu.memory_space<vmem>>, vector<1x16xf32>,
    return
  }
  func.func @transform_0(%arg0: i32) -> i32 {
    %c0_i32 = arith.constant 0 : i32
    %c0_i32_0 = arith.constant 0 : i32
    return %c0_i32 : i32
  }
  func.func @transform_1(%arg0: i32) -> (i32, i32) {
    %c0_i32 = arith.constant 0 : i32
    %c0_i32_0 = arith.constant 0 : i32
    %c0_i32_1 = arith.constant 0 : i32
    return %c0_i32, %c0_i32_0 : i32, i32
  }
  func.func @transform_2(%arg0: i32) -> (i32, i32) {
    %c0_i32 = arith.constant 0 : i32
    %c0_i32_0 = arith.constant 0 : i32
    %c0_i32_1 = arith.constant 0 : i32
    return %c0_i32, %c0_i32_0 : i32, i32
  }
  func.func @transform_3(%arg0: i32) -> (i32, i32, i32) {
    %c0_i32 = arith.constant 0 : i32
    %c0_i32_0 = arith.constant 0 : i32
    %c0_i32_1 = arith.constant 0 : i32
    return %arg0, %c0_i32, %c0_i32_0 : i32, i32, i32
  }
  func.func @transform_4(%arg0: i32) -> (i32, i32) {
    %c0_i32 = arith.constant 0 : i32
    %c0_i32_0 = arith.constant 0 : i32
    %c0_i32_1 = arith.constant 0 : i32
    return %c0_i32, %c0_i32_0 : i32, i32
  }
}

</mosaic_0001>

<llo_original>
// kernel: hypernetwork_forward_seq.1
$region0: #{hypernetwork_forward_seq.1}
  #allocation0 [shape = 'u32[]', space=smem, size = 0x4, offset = 0x4, fixed_abs, tag = 'smem constant byte address 0x4 - core index']
  #allocation1 [shape = 'u32[72,128]{1,0:T(1,128)}', space=vmem, size = 0x9000, scoped, tag = 'internal scratch']
  #allocation2 [shape = 'f32[1,16]{1,0:T(1,128)}', space=vmem, size = 0x200, scoped, tag = 'scratch operand']
  #allocation3 [shape = 'f32[1]{0:T(128)S(6)}', space=smem, size = 0x200, scoped, tag = 'scoped memory for hypernetwork_forward_seq.1']
  %s0 = inlined_call_operand.<no memory space> [shape: f32[1], index: 0, kind: input, shape index: {}]
  %s1 = inlined_call_operand.hbm [shape: f32[64,128], index: 1, kind: input, shape index: {}]
  %s2 = inlined_call_operand.vmem [shape: f32[1,16], index: 2, kind: input, shape index: {}]
  %s3 = inlined_call_operand.hbm [shape: f32[1,2,128], index: 3, kind: output, shape index: {0}]
  %s4 = inlined_call_operand.hbm [shape: f32[1,16], index: 4, kind: output, shape index: {1}]
  %5 = xla_tuple %s3, %s4
  %s6 = sld [smem:[#allocation0]]
  $region38: #{hypernetwork_forward_seq.1} parent=0
    _
  %s8 = ssub.s32 1, %s6
  %s9 = scalar_select 0, %s8, %s6
  %10 = sst [smem:[#allocation3]] %s0
  $region1: #{hypernetwork_forward_seq.1} parent=0
    #allocation4 [shape = 'u8[32768]{0}', space=vmem, size = 0x8000, scoped, tag = 'input window, operand 1, single buffered']
    #allocation5 [shape = 's32[1]{0}', space=sflag, size = 0x4, scoped, tag = 'scoped memory for hypernetwork_forward_seq.1']
    #allocation6 [shape = 's32[1]{0}', space=sflag, size = 0x4, scoped, tag = 'scoped memory for hypernetwork_forward_seq.1']
    #allocation7 [shape = 'u8[1024]{0}', space=vmem, size = 0x400, scoped, tag = 'output window, operand 0, single buffered']
    #allocation8 [shape = 'u8[512]{0}', space=vmem, size = 0x400, scoped, tag = 'output window, operand 1, single buffered']
    #allocation9 [shape = 's32[1]{0}', space=sflag, size = 0x4, scoped, tag = 'scoped memory for hypernetwork_forward_seq.1']
    %11 = vsyncpa [#allocation5], 0
    %12 = vsyncpa [#allocation6], 0
    %13 = vsyncpa [#allocation9], 0
    // Predicated region
    $region2: #{hypernetwork_forward_seq.1} parent=1 // pred_check
      _
    $region3: #{hypernetwork_forward_seq.1} parent=1 // pred_check_branch
      %15 = sbr.rel (0) target = $region5
    $region4: #{hypernetwork_forward_seq.1} parent=1 // pred_region
      _
    $region5: #{hypernetwork_forward_seq.1} parent=1 // pred_fallthru
      _
    // Predicated region
    $region6: #{hypernetwork_forward_seq.1} parent=1 // pred_check
      _
    $region7: #{hypernetwork_forward_seq.1} parent=1 // pred_check_branch
      %17 = sbr.rel (0) target = $region9
    $region8: #{hypernetwork_forward_seq.1} parent=1 // pred_region
      %19 = vsyncadd [#allocation5], 0
      %s20 = sshll.u32 %s1, 4
      %s21 = int_to_ptr.hbm [resolvable:$true] %s20
      %s22 = sshll.u32 [#allocation4], 4
      %s23 = int_to_ptr.vmem [resolvable:$true] %s22
      %28 = dma.hbm_to_vmem [thread:$0]  %s21, 1024, %s23, [#allocation5], 128, 128, 8
    $region9: #{hypernetwork_forward_seq.1} parent=1 // pred_fallthru
      _
    // Predicated region
    $region10: #{hypernetwork_forward_seq.1} parent=1 // pred_check
      _
    $region11: #{hypernetwork_forward_seq.1} parent=1 // pred_check_branch
      %30 = sbr.rel (0) target = $region13
    $region12: #{hypernetwork_forward_seq.1} parent=1 // pred_region
      _
    $region13: #{hypernetwork_forward_seq.1} parent=1 // pred_fallthru
      _
    // Predicated region
    $region14: #{hypernetwork_forward_seq.1} parent=1 // pred_check
      _
    $region15: #{hypernetwork_forward_seq.1} parent=1 // pred_check_branch
      %32 = sbr.rel (0) target = $region17
    $region16: #{hypernetwork_forward_seq.1} parent=1 // pred_region
      %34 = dma.done [#allocation5], 1024
    $region17: #{hypernetwork_forward_seq.1} parent=1 // pred_fallthru
      _
    %p35 = scmp.eq.s32.totalorder 0, 0
    // Predicated region
    $region18: #{hypernetwork_forward_seq.1} parent=1 // pred_check
      %p36 = pneg %p35
    $region19: #{hypernetwork_forward_seq.1} parent=1 // pred_check_branch
      %38 = sbr.rel (%p36) target = $region21
    $region20: #{hypernetwork_forward_seq.1} parent=1 // pred_region
      %v39 = vld [vmem:[%s2] sm:$0x1]
      %vm40 = vcmask 122880
      %41 = vst.msk [vmem:[#allocation2] sm:$0x1] %vm40, %v39
    $region21: #{hypernetwork_forward_seq.1} parent=1 // pred_fallthru
      _
    %v42 = vld [vmem:[#allocation4] sm:$0x1]
    %v43 = vld [vmem:[#allocation4 + $0x1] sm:$0x1]
    %v44 = vld [vmem:[#allocation4 + $0x2] sm:$0x1]
    %v45 = vld [vmem:[#allocation4 + $0x3] sm:$0x1]
    %v46 = vld [vmem:[#allocation4 + $0x4] sm:$0x3]
    %v47 = vld [vmem:[#allocation4 + $0x6] sm:$0x1]
    %v48 = vld [vmem:[#allocation4 + $0x8] sm:$0xff]
    %v49 = vld [vmem:[#allocation4 + $0x10] sm:$0xff]
    %v50 = vld [vmem:[#allocation4 + $0x18] sm:$0xff]
    %v51 = vld [vmem:[#allocation4 + $0x20] sm:$0xff]
    %v52 = vld [vmem:[#allocation4 + $0x28] sm:$0xff]
    %v53 = vld [vmem:[#allocation4 + $0x30] sm:$0xff]
    %s54 = sld [smem:[#allocation3]]
    %v55 = vstv %s54
    %v56 = vlog2.pop %v55
    %v57 = vmul.f32 %v56, 0.6931472
    %v58 = vmul.f32 %v57, 0.4342945
    %v59 = vmul.f32 %v58, %v47
    %v60 = vadd.f32 %v59, %v42
    %v61 = vperm.slane %v60, 0
    %v62 = vadd.f32 %v46, %v61
    %v63 = vmax.f32 %v62, 0.0
    %v64 = vld [vmem:[#allocation2] sm:$0x1]
    %vm65 = vcmask 130048
    %v66 = vsel %vm65, %v63, 0.0
    %v68 = vperm.slane %v64, 0
    %69 = vrot.lane.b32.xlu0 %v68, 16
    %v70 = vpop.permute.xlu0 %69
    %v72 = vsel %vm65, 0.0, %v70
    %v74 = vrot.slane %v72, 6
    %vm76 = vcmask 1041408
    %v77 = vsel %vm76, %v66, %v74
    %vm78 = vcmask 261120
    %v80 = vsel %vm78, %v77, 0
    %82 = vmatpush.msra.mxu0 0.0
    %83 = vmatpush.msra.mxu0 0.0
    %84 = vmatpush.msra.mxu0 0.0
    %85 = vmatpush.msra.mxu0 0.0
    %86 = vmatpush.msra.mxu0 0.0
    %87 = vmatpush.msra.mxu0 0.0
    %88 = vmatpush.msra.mxu0 0.0
    %89 = vmatpush.msra.mxu0 0.0
    %90 = vmatpush.msra.mxu0 0.0
    %91 = vmatpush.msra.mxu0 0.0
    %92 = vmatpush.msra.mxu0 0.0
    %93 = vmatpush.msra.mxu0 0.0
    %94 = vmatpush.msra.mxu0 %v51
    %95 = vmatpush.msra.mxu0 %v50
    %96 = vmatpush.msra.mxu0 %v49
    %97 = vmatpush.msra.mxu0 %v48
    %98 = vmatmul.f32.gmra.mxu0 %v80
    %v99 = vpop.f32.mrf.mxu0
    %v100 = vadd.f32 0.0, %v99
    %101 = vdwg.mxu0
    %v102 = vperm.slane %v43, 0
    %v103 = vadd.f32 %v100, %v102
    %v105 = vrot.slane %v100, 2
    %v107 = vadd.f32 %v103, %v105
    %v108 = vxor.u32 %v107, 2147483648
    %v109 = vmul.f32 %v108, 1.442695
    %v110 = vpow.pop %v109
    %v111 = vadd.f32 %v110, 1.0
    %v112 = vrcp.pop %v111
    %v113 = vmul.f32 %v111, %v112
    %v114 = vsub.f32 1.0, %v113
    %v115 = vmul.f32 %v112, %v114
    %v116 = vadd.f32 %v112, %v115
    %vm117 = vweird.f32 %v111
    %vm118 = vweird.f32 %v112
    %vm119 = vmor %vm117, %vm118
    %v120 = vsel %vm119, %v112, %v116
    %v121 = vand.u32 2147483647, %v111
    %vm122 = vcmp.eq.f32.partialorder %v121, 8.507059e+37
    %v123 = vand.u32 %v111, 2147483648
    %v124 = vor.u32 1.1754944e-38, %v123
    %v125 = vsel %vm122, %v124, %v120
    %v126 = vmul.f32 1.0, %v125
    %v128 = vrot.slane %v44, 6
    %129 = vrot.lane.b32.xlu0 %v128, 32
    %v130 = vpop.permute.xlu0 %129
    %v132 = vadd.f32 %v100, %v130
    %v134 = vrot.slane %v132, 2
    %135 = vrot.lane.b32.xlu0 %v134, 96
    %v136 = vpop.permute.xlu0 %135
    %v138 = vmul.f32 %v126, %v136
    %140 = vrot.lane.b32.xlu0 %v138, 32
    %v141 = vpop.permute.xlu0 %140
    %v143 = vadd.f32 %v103, %v141
    %v144 = vtanh.pop %v143
    %v145 = vsub.f32 1.0, %v126
    %147 = vrot.lane.b32.xlu0 %v144, 112
    %v148 = vpop.permute.xlu0 %147
    %v150 = vmul.f32 %v145, %v148
    %v151 = vmul.f32 %v126, %v70
    %v152 = vadd.f32 %v150, %v151
    %154 = vrot.lane.b32.xlu0 %v152, 112
    %v155 = vpop.permute.xlu0 %154
    %v156 = vsel %vm65, %v155, 0
    %158 = vmatpush.msra.mxu0 0.0
    %159 = vmatpush.msra.mxu0 0.0
    %160 = vmatpush.msra.mxu0 0.0
    %161 = vmatpush.msra.mxu0 0.0
    %162 = vmatpush.msra.mxu0 0.0
    %163 = vmatpush.msra.mxu0 0.0
    %164 = vmatpush.msra.mxu0 0.0
    %165 = vmatpush.msra.mxu0 0.0
    %166 = vmatpush.msra.mxu0 0.0
    %167 = vmatpush.msra.mxu0 0.0
    %168 = vmatpush.msra.mxu0 0.0
    %169 = vmatpush.msra.mxu0 0.0
    %170 = vmatpush.msra.mxu0 0.0
    %171 = vmatpush.msra.mxu0 0.0
    %172 = vmatpush.msra.mxu0 %v51
    %173 = vmatpush.msra.mxu0 %v50
    %174 = vmatmul.f32.gmra.mxu0 %v156
    %v175 = vpop.f32.mrf.mxu0
    %v176 = vadd.f32 0.0, %v175
    %177 = vdwg.mxu0
    %v179 = vrot.slane %v176, 7
    %v181 = vadd.f32 %v103, %v179
    %v182 = vxor.u32 %v181, 2147483648
    %v183 = vmul.f32 %v182, 1.442695
    %v184 = vpow.pop %v183
    %v185 = vadd.f32 %v184, 1.0
    %v186 = vrcp.pop %v185
    %v187 = vmul.f32 %v185, %v186
    %v188 = vsub.f32 1.0, %v187
    %v189 = vmul.f32 %v186, %v188
    %v190 = vadd.f32 %v186, %v189
    %vm191 = vweird.f32 %v185
    %vm192 = vweird.f32 %v186
    %vm193 = vmor %vm191, %vm192
    %v194 = vsel %vm193, %v186, %v190
    %v195 = vand.u32 2147483647, %v185
    %vm196 = vcmp.eq.f32.partialorder %v195, 8.507059e+37
    %v197 = vand.u32 %v185, 2147483648
    %v198 = vor.u32 1.1754944e-38, %v197
    %v199 = vsel %vm196, %v198, %v194
    %v200 = vmul.f32 1.0, %v199
    %201 = vrot.lane.b32.xlu0 %v44, 32
    %v202 = vpop.permute.xlu0 %201
    %v204 = vadd.f32 %v176, %v202
    %v206 = vrot.slane %v204, 7
    %207 = vrot.lane.b32.xlu0 %v206, 96
    %v208 = vpop.permute.xlu0 %207
    %v210 = vmul.f32 %v200, %v208
    %212 = vrot.lane.b32.xlu0 %v210, 32
    %v213 = vpop.permute.xlu0 %212
    %v215 = vadd.f32 %v103, %v213
    %v216 = vtanh.pop %v215
    %v217 = vsub.f32 1.0, %v200
    %219 = vrot.lane.b32.xlu0 %v216, 112
    %v220 = vpop.permute.xlu0 %219
    %v222 = vmul.f32 %v217, %v220
    %v223 = vrot.slane %v152, 7
    %v225 = vmul.f32 %v200, %v223
    %v226 = vadd.f32 %v222, %v225
    %vm227 = vcmask 1040384
    %v228 = vsel %vm227, %v152, %v226
    %v229 = vperm.slane %v45, 0
    %231 = vrot.lane.b32.xlu0 %v228, 112
    %v232 = vpop.permute.xlu0 %231
    %v233 = vsel %vm65, %v232, 0
    %235 = vmatpush.msra.mxu0 0.0
    %236 = vmatpush.msra.mxu0 0.0
    %237 = vmatpush.msra.mxu0 0.0
    %238 = vmatpush.msra.mxu0 0.0
    %239 = vmatpush.msra.mxu0 0.0
    %240 = vmatpush.msra.mxu0 0.0
    %241 = vmatpush.msra.mxu0 0.0
    %242 = vmatpush.msra.mxu0 0.0
    %243 = vmatpush.msra.mxu0 0.0
    %244 = vmatpush.msra.mxu0 0.0
    %245 = vmatpush.msra.mxu0 0.0
    %246 = vmatpush.msra.mxu0 0.0
    %247 = vmatpush.msra.mxu0 0.0
    %248 = vmatpush.msra.mxu0 0.0
    %249 = vmatpush.msra.mxu0 %v53
    %250 = vmatpush.msra.mxu0 %v52
    %251 = vmatmul.f32.gmra.mxu0 %v233
    %v252 = vpop.f32.mrf.mxu0
    %v253 = vadd.f32 %v229, %v252
    %254 = vdwg.mxu0
    %255 = vst [vmem:[#allocation7] sm:$0x3] %v253
    %257 = vrot.lane.b32.xlu0 %v226, 112
    %v258 = vpop.permute.xlu0 %257
    %vm260 = vcmask 123905
    %261 = vst.msk [vmem:[#allocation2 - $0x1] sm:$0x2] %vm260, %v258
    %262 = vst.msk [vmem:[#allocation8 - $0x1] sm:$0x2] %vm260, %v258
    // Predicated region
    $region22: #{hypernetwork_forward_seq.1} parent=1 // pred_check
      _
    $region23: #{hypernetwork_forward_seq.1} parent=1 // pred_check_branch
      %264 = sbr.rel (0) target = $region25
    $region24: #{hypernetwork_forward_seq.1} parent=1 // pred_region
      %266 = vsyncadd [#allocation6], 0
      %s268 = sshll.u32 [#allocation7], 4
      %s269 = int_to_ptr.vmem [resolvable:$true] %s268
      %s270 = sshll.u32 %s3, 4
      %s271 = int_to_ptr.hbm [resolvable:$true] %s270
      %273 = dma.vmem_to_hbm [thread:$0]  %s269, 32, %s271, [#allocation6]
    $region25: #{hypernetwork_forward_seq.1} parent=1 // pred_fallthru
      _
    // Predicated region
    $region26: #{hypernetwork_forward_seq.1} parent=1 // pred_check
      _
    $region27: #{hypernetwork_forward_seq.1} parent=1 // pred_check_branch
      %275 = sbr.rel (0) target = $region29
    $region28: #{hypernetwork_forward_seq.1} parent=1 // pred_region
      %277 = vsyncadd [#allocation9], 0
      %s279 = sshll.u32 [#allocation8], 4
      %s280 = int_to_ptr.vmem [resolvable:$true] %s279
      %s281 = sshll.u32 %s4, 4
      %s282 = int_to_ptr.hbm [resolvable:$true] %s281
      %284 = dma.vmem_to_hbm [thread:$0]  %s280, 16, %s282, [#allocation9]
    $region29: #{hypernetwork_forward_seq.1} parent=1 // pred_fallthru
      _
    // Predicated region
    $region30: #{hypernetwork_forward_seq.1} parent=1 // pred_check
      _
    $region31: #{hypernetwork_forward_seq.1} parent=1 // pred_check_branch
      %286 = sbr.rel (0) target = $region33
    $region32: #{hypernetwork_forward_seq.1} parent=1 // pred_region
      %288 = dma.done [#allocation6], 32
    $region33: #{hypernetwork_forward_seq.1} parent=1 // pred_fallthru
      _
    // Predicated region
    $region34: #{hypernetwork_forward_seq.1} parent=1 // pred_check
      _
    $region35: #{hypernetwork_forward_seq.1} parent=1 // pred_check_branch
      %290 = sbr.rel (0) target = $region37
    $region36: #{hypernetwork_forward_seq.1} parent=1 // pred_region
      %292 = dma.done [#allocation9], 16
    $region37: #{hypernetwork_forward_seq.1} parent=1 // pred_fallthru
      _
    %293 = vsyncpa [#allocation5], 1
    %294 = vsyncpa [#allocation6], 1
    %295 = vsyncpa [#allocation9], 1

</llo_original>
